<compile_context>
chip_gen: v6e
topology: v6e:2x2x1
jax: 0.10.0
libtpu: 0.0.40
codegen_flags: <defaults>
</compile_context>

<pallas_src>
import functools

import jax
import jax.numpy as jnp
from jax import lax
from jax.experimental import pallas as pl
from jax.experimental.pallas import tpu as pltpu

_SMOOTH = 1e-4


def _dice_partial_kernel(logit_ref, target_ref,
                         inter_o, larea_o, tarea_o,
                         inter_acc, larea_acc, tarea_acc,
                         *, num_classes, hw, tile_p, needs_mask):
    i = pl.program_id(1)
    n_pt = pl.num_programs(1)

    @pl.when(i == 0)
    def _():
        inter_acc[...] = jnp.zeros_like(inter_acc)
        larea_acc[...] = jnp.zeros_like(larea_acc)
        tarea_acc[...] = jnp.zeros_like(tarea_acc)

    x = logit_ref[0].astype(jnp.float32)        # (C, TP)
    t = target_ref[0].astype(jnp.int32)         # (1, TP)
    cls = lax.broadcasted_iota(jnp.int32, (num_classes, tile_p), 0)
    oh_b = (t == cls)                           # (C, TP) bool one-hot

    def accumulate(xv, oh_f, p_mask=None):
        # softmax over the class (sublane) axis == F.softmax(logit, dim=1)
        m = jnp.max(xv, axis=0, keepdims=True)
        e = jnp.exp(xv - m)
        s = jnp.sum(e, axis=0, keepdims=True)
        p = e * pl.reciprocal(s, approx=False)  # approx=True possible; keep exact for 1e-5 tol
        if p_mask is not None:
            p = p * p_mask
        inter_acc[...] += jnp.sum(p * oh_f, axis=1, keepdims=True)   # (C, 1)
        larea_acc[...] += jnp.sum(p, axis=1, keepdims=True)
        tarea_acc[...] += jnp.sum(oh_f, axis=1, keepdims=True)

    if not needs_mask:
        accumulate(x, oh_b.astype(jnp.float32))
    else:
        @pl.when(i < n_pt - 1)
        def _():
            accumulate(x, oh_b.astype(jnp.float32))

        @pl.when(i == n_pt - 1)
        def _():
            rem = hw % tile_p                    # static, > 0 since needs_mask
            lane = lax.broadcasted_iota(jnp.int32, (1, tile_p), 1)
            valid_b = lane < rem
            valid_f = valid_b.astype(jnp.float32)
            # Select (not multiply) so garbage / NaN bits in the OOB tail of
            # the unpadded last block never reach exp or the accumulators.
            xm = jnp.where(valid_b, x, 0.0)
            oh_f = jnp.logical_and(oh_b, valid_b).astype(jnp.float32)
            accumulate(xm, oh_f, p_mask=valid_f)

    @pl.when(i == n_pt - 1)
    def _():
        inter_o[0] = inter_acc[...]
        larea_o[0] = larea_acc[...]
        tarea_o[0] = tarea_acc[...]


def _round_up(x, m):
    return ((x + m - 1) // m) * m


@functools.partial(jax.jit, static_argnums=(2,))
def dice_loss_pallas(logit, target, num_classes):
    """logit: (N, C, H, W) float; target: (N, H, W) int.  Returns scalar f32."""
    N, C, H, W = logit.shape
    assert C == num_classes
    HW = H * W

    # Free reshapes: NCHW is already (C, H*W)-contiguous per sample.
    logit3 = logit.reshape(N, C, HW)             # keep input dtype (bf16 ok)
    if not jnp.issubdtype(target.dtype, jnp.integer):
        target = target.astype(jnp.int32)
    target3 = target.reshape(N, 1, HW)

    # Tile sizing: ~4 MiB of input per pipeline step (x2 double-buffered),
    # lane-aligned, capped at 64K pixels and at the rounded-up row length.
    per_px = (C * jnp.dtype(logit3.dtype).itemsize
              + jnp.dtype(target3.dtype).itemsize)
    cand = (4 * 1024 * 1024) // per_px
    cand = max(128, (cand // 128) * 128)
    cand = min(cand, 65536)
    tile_p = min(cand, _round_up(HW, 128))
    n_pt = -(-HW // tile_p)                      # ceil-div (Python-side)
    needs_mask = (HW % tile_p) != 0

    kernel = functools.partial(
        _dice_partial_kernel,
        num_classes=C, hw=HW, tile_p=tile_p, needs_mask=needs_mask)

    out_shape = (jax.ShapeDtypeStruct((N, C, 1), jnp.float32),
                 jax.ShapeDtypeStruct((N, C, 1), jnp.float32),
                 jax.ShapeDtypeStruct((N, C, 1), jnp.float32))

    inter_p, larea_p, tarea_p = pl.pallas_call(
        kernel,
        out_shape=out_shape,
        grid_spec=pltpu.PrefetchScalarGridSpec(
            num_scalar_prefetch=0,
            grid=(N, n_pt),
            in_specs=[
                pl.BlockSpec((1, C, tile_p), lambda n, i: (n, 0, i)),
                pl.BlockSpec((1, 1, tile_p), lambda n, i: (n, 0, i)),
            ],
            out_specs=[
                pl.BlockSpec((1, C, 1), lambda n, i: (n, 0, 0)),
                pl.BlockSpec((1, C, 1), lambda n, i: (n, 0, 0)),
                pl.BlockSpec((1, C, 1), lambda n, i: (n, 0, 0)),
            ],
            scratch_shapes=[
                pltpu.VMEM((C, 1), jnp.float32),
                pltpu.VMEM((C, 1), jnp.float32),
                pltpu.VMEM((C, 1), jnp.float32),
            ],
        ),
        compiler_params=pltpu.CompilerParams(
            dimension_semantics=("parallel", "arbitrary"),
            vmem_limit_bytes=32 * 1024 * 1024),
    )(logit3, target3)

    # Tiny epilogue in JAX: reduce over batch, per-class dice, mean, 1 - dice.
    inter = jnp.sum(inter_p[:, :, 0], axis=0)    # (C,)
    larea = jnp.sum(larea_p[:, :, 0], axis=0)
    tarea = jnp.sum(tarea_p[:, :, 0], axis=0)
    dice = jnp.mean((2.0 * inter + _SMOOTH) / (larea + tarea + _SMOOTH))
    return (1.0 - dice).astype(jnp.float32)


def dice_loss_ref(logit, target, num_classes):
    """Pure-JAX reference matching the PyTorch module."""
    p = jax.nn.softmax(logit.astype(jnp.float32), axis=1)
    oh = jax.nn.one_hot(target, num_classes, dtype=jnp.float32)   # (N,H,W,C)
    oh = jnp.transpose(oh, (0, 3, 1, 2))                          # (N,C,H,W)
    inter = jnp.sum(p * oh, axis=(0, 2, 3))
    la = jnp.sum(p, axis=(0, 2, 3))
    ta = jnp.sum(oh, axis=(0, 2, 3))
    dice = jnp.mean((2.0 * inter + _SMOOTH) / (la + ta + _SMOOTH))
    return 1.0 - dice


if __name__ == "__main__":
    N, C, H, W = 2, 4, 16, 16
    key = jax.random.PRNGKey(0)
    k_logit, k_target = jax.random.split(key)
    logit = jax.random.normal(k_logit, (N, C, H, W), dtype=jnp.float32)
    target = jax.random.randint(k_target, (N, H, W), 0, C, dtype=jnp.int32)

    loss = jax.block_until_ready(dice_loss_pallas(logit, target, C))
    ref = jax.block_until_ready(dice_loss_ref(logit, target, C))

    assert jnp.allclose(loss, ref, atol=1e-5, rtol=1e-5), (loss, ref)
    print("KERNEL_OK")
</pallas_src>

<mosaic_0001>
module attributes {stable_mosaic.version = 11 : i64} {
  func.func @_dice_partial_kernel(%arg0: i32, %arg1: i32, %arg2: memref<1x4x256xf32, #tpu.memory_space<vmem>>, %arg3: memref<1x1x256xi32, #tpu.memory_space<vmem>>, %arg4: memref<1x4x1xf32, #tpu.memory_space<vmem>>, %arg5: memref<1x4x1xf32, #tpu.memory_space<vmem>>, %arg6: memref<1x4x1xf32, #tpu.memory_space<vmem>>, %arg7: memref<4x1xf32, #tpu.memory_space<vmem>>, %arg8: memref<4x1xf32, #tpu.memory_space<vmem>>, %arg9: memref<4x1xf32, #tpu.memory_space<vmem>>) attributes {dimension_semantics = [#tpu.dimension_semantics<parallel>, #tpu.dimension_semantics<arbitrary>], iteration_bounds = array<i64: 2, 1>, scalar_prefetch = 0 : i64, scratch_operands = 3 : i64, tpu.core_type = #tpu.core_type<tc>, window_params = [{transform_indices = @transform_0, window_bounds = array<i64: 1, 4, 256>}, {transform_indices = @transform_1, window_bounds = array<i64: 1, 1, 256>}, {transform_indices = @transform_2, window_bounds = array<i64: 1, 4, 1>}, {transform_indices = @transform_3, window_bounds = array<i64: 1, 4, 1>}, {transform_indices = @transform_4, window_bounds = array<i64: 1, 4, 1>}]} {
    %c0_i32 = arith.constant 0 : i32
    %0 = arith.cmpi eq, %arg1, %c0_i32 : i32
    %1 = arith.extui %0 : i1 to i32
    %c0_i32_0 = arith.constant 0 : i32
    %2 = arith.cmpi ne, %1, %c0_i32_0 : i32
    scf.if %2 {
      %cst_24 = arith.constant 0.000000e+00 : f32
      %41 = vector.broadcast %cst_24 : f32 to vector<4x1xf32>
      %c0_25 = arith.constant 0 : index
      %c0_26 = arith.constant 0 : index
      %42 = vector.load %arg7[%c0_25, %c0_26] : memref<4x1xf32, #tpu.memory_space<vmem>>, vector<4x1xf32>
      tpu.vector_store %arg7[%c0_25, %c0_26], %41 {strides = array<i32>} : memref<4x1xf32, #tpu.memory_space<vmem>>, vector<4x1xf32>,
      %cst_27 = arith.constant 0.000000e+00 : f32
      %43 = vector.broadcast %cst_27 : f32 to vector<4x1xf32>
      %c0_28 = arith.constant 0 : index
      %c0_29 = arith.constant 0 : index
      %44 = vector.load %arg8[%c0_28, %c0_29] : memref<4x1xf32, #tpu.memory_space<vmem>>, vector<4x1xf32>
      tpu.vector_store %arg8[%c0_28, %c0_29], %43 {strides = array<i32>} : memref<4x1xf32, #tpu.memory_space<vmem>>, vector<4x1xf32>,
      %cst_30 = arith.constant 0.000000e+00 : f32
      %45 = vector.broadcast %cst_30 : f32 to vector<4x1xf32>
      %c0_31 = arith.constant 0 : index
      %c0_32 = arith.constant 0 : index
      %46 = vector.load %arg9[%c0_31, %c0_32] : memref<4x1xf32, #tpu.memory_space<vmem>>, vector<4x1xf32>
      tpu.vector_store %arg9[%c0_31, %c0_32], %45 {strides = array<i32>} : memref<4x1xf32, #tpu.memory_space<vmem>>, vector<4x1xf32>,
    } else {
    }
    %c0 = arith.constant 0 : index
    %c0_1 = arith.constant 0 : index
    %c0_2 = arith.constant 0 : index
    %3 = vector.load %arg2[%c0, %c0_1, %c0_2] : memref<1x4x256xf32, #tpu.memory_space<vmem>>, vector<1x4x256xf32>
    %4 = vector.shape_cast %3 : vector<1x4x256xf32> to vector<4x256xf32>
    %c0_3 = arith.constant 0 : index
    %c0_4 = arith.constant 0 : index
    %c0_5 = arith.constant 0 : index
    %5 = vector.load %arg3[%c0_3, %c0_4, %c0_5] : memref<1x1x256xi32, #tpu.memory_space<vmem>>, vector<1x1x256xi32>
    %6 = vector.shape_cast %5 : vector<1x1x256xi32> to vector<1x256xi32>
    %7 = tpu.iota {dimensions = array<i32: 0>} : vector<4x256xi32>
    %8 = vector.broadcast %6 : vector<1x256xi32> to vector<4x256xi32>
    %9 = arith.cmpi eq, %8, %7 : vector<4x256xi32>
    %10 = arith.extui %9 : vector<4x256xi1> to vector<4x256xi32>
    %11 = arith.sitofp %10 : vector<4x256xi32> to vector<4x256xf32>
    %cst = arith.constant dense<0xFF800000> : vector<256xf32>
    %12 = vector.multi_reduction <maximumf>, %4, %cst [0] : vector<4x256xf32> to vector<256xf32>
    %13 = vector.shape_cast %12 : vector<256xf32> to vector<1x256xf32>
    %14 = vector.broadcast %13 : vector<1x256xf32> to vector<4x256xf32>
    %15 = arith.subf %4, %14 : vector<4x256xf32>
    %16 = math.exp %15 : vector<4x256xf32>
    %cst_6 = arith.constant dense<0.000000e+00> : vector<256xf32>
    %17 = vector.multi_reduction <add>, %16, %cst_6 [0] : vector<4x256xf32> to vector<256xf32>
    %18 = vector.shape_cast %17 : vector<256xf32> to vector<1x256xf32>
    %19 = tpu.reciprocal %18 : vector<1x256xf32> -> vector<1x256xf32>
    %20 = vector.broadcast %19 : vector<1x256xf32> to vector<4x256xf32>
    %21 = arith.mulf %16, %20 : vector<4x256xf32>
    %c0_7 = arith.constant 0 : index
    %c0_8 = arith.constant 0 : index
    %22 = vector.load %arg7[%c0_7, %c0_8] : memref<4x1xf32, #tpu.memory_space<vmem>>, vector<4x1xf32>
    %23 = arith.mulf %21, %11 : vector<4x256xf32>
    %cst_9 = arith.constant dense<0.000000e+00> : vector<4xf32>
    %24 = vector.multi_reduction <add>, %23, %cst_9 [1] : vector<4x256xf32> to vector<4xf32>
    %25 = vector.shape_cast %24 : vector<4xf32> to vector<4x1xf32>
    %26 = arith.addf %22, %25 : vector<4x1xf32>
    %c0_10 = arith.constant 0 : index
    %c0_11 = arith.constant 0 : index
    %27 = vector.load %arg7[%c0_10, %c0_11] : memref<4x1xf32, #tpu.memory_space<vmem>>, vector<4x1xf32>
    tpu.vector_store %arg7[%c0_10, %c0_11], %26 {strides = array<i32>} : memref<4x1xf32, #tpu.memory_space<vmem>>, vector<4x1xf32>,
    %c0_12 = arith.constant 0 : index
    %c0_13 = arith.constant 0 : index
    %28 = vector.load %arg8[%c0_12, %c0_13] : memref<4x1xf32, #tpu.memory_space<vmem>>, vector<4x1xf32>
    %cst_14 = arith.constant dense<0.000000e+00> : vector<4xf32>
    %29 = vector.multi_reduction <add>, %21, %cst_14 [1] : vector<4x256xf32> to vector<4xf32>
    %30 = vector.shape_cast %29 : vector<4xf32> to vector<4x1xf32>
    %31 = arith.addf %28, %30 : vector<4x1xf32>
    %c0_15 = arith.constant 0 : index
    %c0_16 = arith.constant 0 : index
    %32 = vector.load %arg8[%c0_15, %c0_16] : memref<4x1xf32, #tpu.memory_space<vmem>>, vector<4x1xf32>
    tpu.vector_store %arg8[%c0_15, %c0_16], %31 {strides = array<i32>} : memref<4x1xf32, #tpu.memory_space<vmem>>, vector<4x1xf32>,
    %c0_17 = arith.constant 0 : index
    %c0_18 = arith.constant 0 : index
    %33 = vector.load %arg9[%c0_17, %c0_18] : memref<4x1xf32, #tpu.memory_space<vmem>>, vector<4x1xf32>
    %cst_19 = arith.constant dense<0.000000e+00> : vector<4xf32>
    %34 = vector.multi_reduction <add>, %11, %cst_19 [1] : vector<4x256xf32> to vector<4xf32>
    %35 = vector.shape_cast %34 : vector<4xf32> to vector<4x1xf32>
    %36 = arith.addf %33, %35 : vector<4x1xf32>
    %c0_20 = arith.constant 0 : index
    %c0_21 = arith.constant 0 : index
    %37 = vector.load %arg9[%c0_20, %c0_21] : memref<4x1xf32, #tpu.memory_space<vmem>>, vector<4x1xf32>
    tpu.vector_store %arg9[%c0_20, %c0_21], %36 {strides = array<i32>} : memref<4x1xf32, #tpu.memory_space<vmem>>, vector<4x1xf32>,
    %c0_i32_22 = arith.constant 0 : i32
    %38 = arith.cmpi eq, %arg1, %c0_i32_22 : i32
    %39 = arith.extui %38 : i1 to i32
    %c0_i32_23 = arith.constant 0 : i32
    %40 = arith.cmpi ne, %39, %c0_i32_23 : i32
    scf.if %40 {
      %c0_24 = arith.constant 0 : index
      %c0_25 = arith.constant 0 : index
      %41 = vector.load %arg7[%c0_24, %c0_25] : memref<4x1xf32, #tpu.memory_space<vmem>>, vector<4x1xf32>
      %c0_26 = arith.constant 0 : index
      %c0_27 = arith.constant 0 : index
      %c0_28 = arith.constant 0 : index
      %42 = vector.load %arg4[%c0_26, %c0_27, %c0_28] : memref<1x4x1xf32, #tpu.memory_space<vmem>>, vector<1x4x1xf32>
      %43 = vector.shape_cast %42 : vector<1x4x1xf32> to vector<4x1xf32>
      %44 = vector.shape_cast %41 : vector<4x1xf32> to vector<1x4x1xf32>
      tpu.vector_store %arg4[%c0_26, %c0_27, %c0_28], %44 {strides = array<i32>} : memref<1x4x1xf32, #tpu.memory_space<vmem>>, vector<1x4x1xf32>,
      %c0_29 = arith.constant 0 : index
      %c0_30 = arith.constant 0 : index
      %45 = vector.load %arg8[%c0_29, %c0_30] : memref<4x1xf32, #tpu.memory_space<vmem>>, vector<4x1xf32>
      %c0_31 = arith.constant 0 : index
      %c0_32 = arith.constant 0 : index
      %c0_33 = arith.constant 0 : index
      %46 = vector.load %arg5[%c0_31, %c0_32, %c0_33] : memref<1x4x1xf32, #tpu.memory_space<vmem>>, vector<1x4x1xf32>
      %47 = vector.shape_cast %46 : vector<1x4x1xf32> to vector<4x1xf32>
      %48 = vector.shape_cast %45 : vector<4x1xf32> to vector<1x4x1xf32>
      tpu.vector_store %arg5[%c0_31, %c0_32, %c0_33], %48 {strides = array<i32>} : memref<1x4x1xf32, #tpu.memory_space<vmem>>, vector<1x4x1xf32>,
      %c0_34 = arith.constant 0 : index
      %c0_35 = arith.constant 0 : index
      %49 = vector.load %arg9[%c0_34, %c0_35] : memref<4x1xf32, #tpu.memory_space<vmem>>, vector<4x1xf32>
      %c0_36 = arith.constant 0 : index
      %c0_37 = arith.constant 0 : index
      %c0_38 = arith.constant 0 : index
      %50 = vector.load %arg6[%c0_36, %c0_37, %c0_38] : memref<1x4x1xf32, #tpu.memory_space<vmem>>, vector<1x4x1xf32>
      %51 = vector.shape_cast %50 : vector<1x4x1xf32> to vector<4x1xf32>
      %52 = vector.shape_cast %49 : vector<4x1xf32> to vector<1x4x1xf32>
      tpu.vector_store %arg6[%c0_36, %c0_37, %c0_38], %52 {strides = array<i32>} : memref<1x4x1xf32, #tpu.memory_space<vmem>>, vector<1x4x1xf32>,
    } else {
    }
    return
  }
  func.func @transform_0(%arg0: i32, %arg1: i32) -> (i32, i32, i32) {
    %c0_i32 = arith.constant 0 : i32
    %c0_i32_0 = arith.constant 0 : i32
    return %arg0, %c0_i32, %arg1 : i32, i32, i32
  }
  func.func @transform_1(%arg0: i32, %arg1: i32) -> (i32, i32, i32) {
    %c0_i32 = arith.constant 0 : i32
    %c0_i32_0 = arith.constant 0 : i32
    return %arg0, %c0_i32, %arg1 : i32, i32, i32
  }
  func.func @transform_2(%arg0: i32, %arg1: i32) -> (i32, i32, i32) {
    %c0_i32 = arith.constant 0 : i32
    %c0_i32_0 = arith.constant 0 : i32
    %c0_i32_1 = arith.constant 0 : i32
    return %arg0, %c0_i32, %c0_i32_0 : i32, i32, i32
  }
  func.func @transform_3(%arg0: i32, %arg1: i32) -> (i32, i32, i32) {
    %c0_i32 = arith.constant 0 : i32
    %c0_i32_0 = arith.constant 0 : i32
    %c0_i32_1 = arith.constant 0 : i32
    return %arg0, %c0_i32, %c0_i32_0 : i32, i32, i32
  }
  func.func @transform_4(%arg0: i32, %arg1: i32) -> (i32, i32, i32) {
    %c0_i32 = arith.constant 0 : i32
    %c0_i32_0 = arith.constant 0 : i32
    %c0_i32_1 = arith.constant 0 : i32
    return %arg0, %c0_i32, %c0_i32_0 : i32, i32, i32
  }
}

</mosaic_0001>

<llo_original>
// kernel: dice_loss_pallas.1
$region0: #{dice_loss_pallas.1}
  #allocation0 [shape = 'u32[]', space=smem, size = 0x4, offset = 0x4, fixed_abs, tag = 'smem constant byte address 0x4 - core index']
  #allocation1 [shape = 'u32[144,128]{1,0:T(1,128)}', space=vmem, size = 0x12000, scoped, tag = 'internal scratch']
  #allocation2 [shape = 'f32[4,1]{1,0:T(4,128)}', space=vmem, size = 0x800, scoped, tag = 'scratch operand']
  #allocation3 [shape = 'f32[4,1]{1,0:T(4,128)}', space=vmem, size = 0x800, scoped, tag = 'scratch operand']
  #allocation4 [shape = 'f32[4,1]{1,0:T(4,128)}', space=vmem, size = 0x800, scoped, tag = 'scratch operand']
  %s0 = inlined_call_operand.vmem [shape: f32[2,4,256], index: 0, kind: input, shape index: {}]
  %s1 = inlined_call_operand.vmem [shape: s32[2,1,256], index: 1, kind: input, shape index: {}]
  %s2 = inlined_call_operand.vmem [shape: f32[2,4,1], index: 2, kind: output, shape index: {0}]
  %s3 = inlined_call_operand.vmem [shape: f32[2,4,1], index: 3, kind: output, shape index: {1}]
  %s4 = inlined_call_operand.vmem [shape: f32[2,4,1], index: 4, kind: output, shape index: {2}]
  %5 = xla_tuple %s2, %s3, %s4
  %s6 = sld [smem:[#allocation0]]
  $region65: #{dice_loss_pallas.1} parent=0
    _
  %s8 = ssub.s32 1, %s6
  %s9 = scalar_select 0, %s8, %s6
  loop: start=0, step=1, limit=4
  $region2: #{dice_loss_pallas.1} parent=0 // loop_pre_header
    _
  $region3: #{dice_loss_pallas.1} parent=0 // loop_header
    %s11 = sphi 0, %s15
    %p12 = scmp.ge.s32.totalorder %s11, 4
    %s18 = sphi 0, %s30
    %s19 = sphi 0, %s26
    %s20 = sphi 0, %s18
    %s21 = sphi 0, %s19
    %s22 = sphi 0, %s20
    %s23 = sphi 0, %s21
    %s35 = sphi 0, %s37
    %s38 = sphi 0, %s35
    %s39 = sphi 0, %s38
    %s55 = sphi 0, %s39
    %s63 = sphi 0, %s65
    %s66 = sphi 0, %s63
    %s67 = sphi 0, %s66
    %s83 = sphi 0, %s67
    %s89 = sphi 0, %s91
    %s92 = sphi 0, %s89
    %s93 = sphi 0, %s92
    %s109 = sphi 0, %s93
    %s115 = sphi 0, %s117
    %s118 = sphi 0, %s115
    %s119 = sphi 0, %s118
    %s135 = sphi 0, %s119
    %s141 = sphi 0, %s143
    %s144 = sphi 0, %s141
    %s145 = sphi 0, %s144
    %s161 = sphi 0, %s145
  $region4: #{dice_loss_pallas.1} parent=0 // loop_header_branch
    %14 = sbr.rel (%p12) target = $region8
  $region5: #{dice_loss_pallas.1} parent=0 // loop_body
    %s16 = ssub.s32 %s11, 1
    %s17 = ssub.s32 %s11, 2
    %s24 = sadd.s32 1, %s19
    %p25 = scmp.ge.s32.totalorder %s24, 1
    %s26 = scalar_select %p25, 0, %s24
    %s27 = sadd.s32 1, %s18
    %s28 = scalar_select %p25, %s27, %s18
    %p29 = scmp.ge.s32.totalorder %s28, 2
    %s30 = scalar_select %p29, 0, %s28
    %s31 = ssub.s32 %s18, %s30
    %s32 = ssub.s32 %s19, %s26
    %s33 = sor.u32 %s31, %s32
    %p34 = scmp.eq.s32.totalorder %s33, 0
    %s36 = sadd.s32 %s35, 1
    %s37 = scalar_select %p34, %s35, %s36
    %p40 = pneg %p34
    %p41 = scmp.eq.s32.totalorder %s11, 1
    %p42 = por %p40, %p41
    %p43 = scmp.ne.s32.totalorder %s35, %s38
    %p44 = scmp.eq.s32.totalorder %s11, 0
    %p45 = por %p43, %p44
    %p46 = scmp.ne.s32.totalorder %s35, %s38
    %p47 = scmp.eq.s32.totalorder %s16, 1
    %p48 = por %p46, %p47
    %p49 = scmp.ne.s32.totalorder %s38, %s39
    %p50 = scmp.eq.s32.totalorder %s16, 0
    %p51 = por %p49, %p50
    %p52 = scmp.ne.s32.totalorder %s38, %s39
    %p53 = scmp.eq.s32.totalorder %s17, 1
    %p54 = por %p52, %p53
    %p56 = scmp.ne.s32.totalorder %s39, %s55
    %p57 = scmp.eq.s32.totalorder %s17, 0
    %p58 = por %p56, %p57
    %s59 = ssub.s32 %s18, %s30
    %s60 = ssub.s32 %s19, %s26
    %s61 = sor.u32 %s59, %s60
    %p62 = scmp.eq.s32.totalorder %s61, 0
    %s64 = sadd.s32 %s63, 1
    %s65 = scalar_select %p62, %s63, %s64
    %p68 = pneg %p62
    %p69 = scmp.eq.s32.totalorder %s11, 1
    %p70 = por %p68, %p69
    %p71 = scmp.ne.s32.totalorder %s63, %s66
    %p72 = scmp.eq.s32.totalorder %s11, 0
    %p73 = por %p71, %p72
    %p74 = scmp.ne.s32.totalorder %s63, %s66
    %p75 = scmp.eq.s32.totalorder %s16, 1
    %p76 = por %p74, %p75
    %p77 = scmp.ne.s32.totalorder %s66, %s67
    %p78 = scmp.eq.s32.totalorder %s16, 0
    %p79 = por %p77, %p78
    %p80 = scmp.ne.s32.totalorder %s66, %s67
    %p81 = scmp.eq.s32.totalorder %s17, 1
    %p82 = por %p80, %p81
    %p84 = scmp.ne.s32.totalorder %s67, %s83
    %p85 = scmp.eq.s32.totalorder %s17, 0
    %p86 = por %p84, %p85
    %s87 = ssub.s32 %s18, %s30
    %p88 = scmp.eq.s32.totalorder %s87, 0
    %s90 = sadd.s32 %s89, 1
    %s91 = scalar_select %p88, %s89, %s90
    %p94 = pneg %p88
    %p95 = scmp.eq.s32.totalorder %s11, 1
    %p96 = por %p94, %p95
    %p97 = scmp.ne.s32.totalorder %s89, %s92
    %p98 = scmp.eq.s32.totalorder %s11, 0
    %p99 = por %p97, %p98
    %p100 = scmp.ne.s32.totalorder %s89, %s92
    %p101 = scmp.eq.s32.totalorder %s16, 1
    %p102 = por %p100, %p101
    %p103 = scmp.ne.s32.totalorder %s92, %s93
    %p104 = scmp.eq.s32.totalorder %s16, 0
    %p105 = por %p103, %p104
    %p106 = scmp.ne.s32.totalorder %s92, %s93
    %p107 = scmp.eq.s32.totalorder %s17, 1
    %p108 = por %p106, %p107
    %p110 = scmp.ne.s32.totalorder %s93, %s109
    %p111 = scmp.eq.s32.totalorder %s17, 0
    %p112 = por %p110, %p111
    %s113 = ssub.s32 %s18, %s30
    %p114 = scmp.eq.s32.totalorder %s113, 0
    %s116 = sadd.s32 %s115, 1
    %s117 = scalar_select %p114, %s115, %s116
    %p120 = pneg %p114
    %p121 = scmp.eq.s32.totalorder %s11, 1
    %p122 = por %p120, %p121
    %p123 = scmp.ne.s32.totalorder %s115, %s118
    %p124 = scmp.eq.s32.totalorder %s11, 0
    %p125 = por %p123, %p124
    %p126 = scmp.ne.s32.totalorder %s115, %s118
    %p127 = scmp.eq.s32.totalorder %s16, 1
    %p128 = por %p126, %p127
    %p129 = scmp.ne.s32.totalorder %s118, %s119
    %p130 = scmp.eq.s32.totalorder %s16, 0
    %p131 = por %p129, %p130
    %p132 = scmp.ne.s32.totalorder %s118, %s119
    %p133 = scmp.eq.s32.totalorder %s17, 1
    %p134 = por %p132, %p133
    %p136 = scmp.ne.s32.totalorder %s119, %s135
    %p137 = scmp.eq.s32.totalorder %s17, 0
    %p138 = por %p136, %p137
    %s139 = ssub.s32 %s18, %s30
    %p140 = scmp.eq.s32.totalorder %s139, 0
    %s142 = sadd.s32 %s141, 1
    %s143 = scalar_select %p140, %s141, %s142
    %p146 = pneg %p140
    %p147 = scmp.eq.s32.totalorder %s11, 1
    %p148 = por %p146, %p147
    %p149 = scmp.ne.s32.totalorder %s141, %s144
    %p150 = scmp.eq.s32.totalorder %s11, 0
    %p151 = por %p149, %p150
    %p152 = scmp.ne.s32.totalorder %s141, %s144
    %p153 = scmp.eq.s32.totalorder %s16, 1
    %p154 = por %p152, %p153
    %p155 = scmp.ne.s32.totalorder %s144, %s145
    %p156 = scmp.eq.s32.totalorder %s16, 0
    %p157 = por %p155, %p156
    %p158 = scmp.ne.s32.totalorder %s144, %s145
    %p159 = scmp.eq.s32.totalorder %s17, 1
    %p160 = por %p158, %p159
    %p162 = scmp.ne.s32.totalorder %s145, %s161
    %p163 = scmp.eq.s32.totalorder %s17, 0
    %p164 = por %p162, %p163
    %p165 = scmp.le.s32.totalorder 1, %s11
    %p166 = scmp.lt.s32.totalorder %s11, 3
    %p167 = pnand %p165, %p166
    %p168 = pneg %p167
    // Predicated region
    $region9: #{dice_loss_pallas.1} parent=5 // pred_check
      _
    $region10: #{dice_loss_pallas.1} parent=5 // pred_check_branch
      %170 = sbr.rel (%p167) target = $region12
    $region11: #{dice_loss_pallas.1} parent=5 // pred_region
      %s171 = ssub.s32 %s11, 1
    $region12: #{dice_loss_pallas.1} parent=5 // pred_fallthru
      _
    %p172 = scmp.lt.s32.totalorder %s11, 2
    // Predicated region
    $region13: #{dice_loss_pallas.1} parent=5 // pred_check
      %p173 = pneg %p172
    $region14: #{dice_loss_pallas.1} parent=5 // pred_check_branch
      %175 = sbr.rel (%p173) target = $region16
    $region15: #{dice_loss_pallas.1} parent=5 // pred_region
      // Predicated region
      $region17: #{dice_loss_pallas.1} parent=15 // pred_check
        %p176 = pneg %p45
      $region18: #{dice_loss_pallas.1} parent=15 // pred_check_branch
        %178 = sbr.rel (%p176) target = $region20
      $region19: #{dice_loss_pallas.1} parent=15 // pred_region
        %s179 = smul.u32 2, %s19
        %p180 = scmp.lt.s32.totalorder %s18, 1
        %s181 = scalar_select %p180, %s18, 1
        %p182 = scmp.lt.s32.totalorder %s179, 1
        %s183 = scalar_select %p182, %s179, 1
        %s184 = smul.addr %s181, 2
        %s185 = sadd.s32 %s183, %s184
        %s186 = smul.addr %s185, 4
        %s187 = scalar_lea.vmem %s0, %s186
        %s188 = smul.u32 2, %s19
      $region20: #{dice_loss_pallas.1} parent=15 // pred_fallthru
        _
      // Predicated region
      $region21: #{dice_loss_pallas.1} parent=15 // pred_check
        %p189 = pneg %p73
      $region22: #{dice_loss_pallas.1} parent=15 // pred_check_branch
        %191 = sbr.rel (%p189) target = $region24
      $region23: #{dice_loss_pallas.1} parent=15 // pred_region
        %s192 = smul.u32 2, %s19
        %p193 = scmp.lt.s32.totalorder %s18, 1
        %s194 = scalar_select %p193, %s18, 1
        %p195 = scmp.lt.s32.totalorder %s192, 1
        %s196 = scalar_select %p195, %s192, 1
        %s197 = smul.addr %s194, 2
        %s198 = sadd.s32 %s196, %s197
        %s199 = scalar_lea.vmem %s1, %s198
        %s200 = smul.u32 2, %s19
      $region24: #{dice_loss_pallas.1} parent=15 // pred_fallthru
        _
    $region16: #{dice_loss_pallas.1} parent=5 // pred_fallthru
      _
    %p201 = scmp.le.s32.totalorder 1, %s11
    %p202 = scmp.lt.s32.totalorder %s11, 3
    %p203 = pnand %p201, %p202
    %p204 = pneg %p203
    // Predicated region
    $region25: #{dice_loss_pallas.1} parent=5 // pred_check
      _
    $region26: #{dice_loss_pallas.1} parent=5 // pred_check_branch
      %206 = sbr.rel (%p203) target = $region28
    $region27: #{dice_loss_pallas.1} parent=5 // pred_region
      %s207 = ssub.s32 %s11, 1
      %s208 = smul.u32 2, %s21
      %p209 = scmp.lt.s32.totalorder %s20, 1
      %s210 = scalar_select %p209, %s20, 1
      %p211 = scmp.lt.s32.totalorder %s208, 1
      %s212 = scalar_select %p211, %s208, 1
      %s213 = smul.addr %s210, 2
      %s214 = sadd.s32 %s212, %s213
      %s215 = smul.addr %s214, 4
      %s216 = scalar_lea.vmem %s0, %s215
      %p217 = pneg %p51
      %p218 = pneg %p48
      %s219 = smul.u32 2, %s21
      %p220 = scmp.lt.s32.totalorder %s20, 1
      %s221 = scalar_select %p220, %s20, 1
      %p222 = scmp.lt.s32.totalorder %s219, 1
      %s223 = scalar_select %p222, %s219, 1
      %s224 = smul.addr %s221, 2
      %s225 = sadd.s32 %s223, %s224
      %s226 = scalar_lea.vmem %s1, %s225
      %p227 = pneg %p79
      %p228 = pneg %p76
      %p229 = pneg %p105
      %p230 = pneg %p102
      %p231 = scmp.lt.s32.totalorder %s20, 1
      %s232 = scalar_select %p231, %s20, 1
      %s233 = smul.addr %s232, 4
      %s234 = scalar_lea.vmem %s2, %s233
      %p235 = pneg %p131
      %p236 = pneg %p128
      %p237 = scmp.lt.s32.totalorder %s20, 1
      %s238 = scalar_select %p237, %s20, 1
      %s239 = smul.addr %s238, 4
      %s240 = scalar_lea.vmem %s3, %s239
      %p241 = pneg %p157
      %p242 = pneg %p154
      %p243 = scmp.lt.s32.totalorder %s20, 1
      %s244 = scalar_select %p243, %s20, 1
      %s245 = smul.addr %s244, 4
      %s246 = scalar_lea.vmem %s4, %s245
      %s247 = smul.u32 2, %s21
      %p248 = scmp.lt.s32.totalorder %s20, 1
      %s249 = scalar_select %p248, %s20, 1
      %p250 = scmp.lt.s32.totalorder %s247, 1
      %s251 = scalar_select %p250, %s247, 1
      %s252 = smul.addr %s249, 2
      %s253 = sadd.s32 %s251, %s252
      %s254 = smul.addr %s253, 4
      %s255 = scalar_lea.vmem %s0, %s254
      %s256 = smul.u32 2, %s21
      %s257 = smul.u32 2, %s21
      %p258 = scmp.lt.s32.totalorder %s20, 1
      %s259 = scalar_select %p258, %s20, 1
      %p260 = scmp.lt.s32.totalorder %s257, 1
      %s261 = scalar_select %p260, %s257, 1
      %s262 = smul.addr %s259, 2
      %s263 = sadd.s32 %s261, %s262
      %s264 = scalar_lea.vmem %s1, %s263
      %s265 = smul.u32 2, %s21
      %p266 = scmp.lt.s32.totalorder %s20, 1
      %s267 = scalar_select %p266, %s20, 1
      %s268 = smul.addr %s267, 4
      %s269 = scalar_lea.vmem %s2, %s268
      %p270 = scmp.lt.s32.totalorder %s20, 1
      %s271 = scalar_select %p270, %s20, 1
      %s272 = smul.addr %s271, 4
      %s273 = scalar_lea.vmem %s3, %s272
      %p274 = scmp.lt.s32.totalorder %s20, 1
      %s275 = scalar_select %p274, %s20, 1
      %s276 = smul.addr %s275, 4
      %s277 = scalar_lea.vmem %s4, %s276
      %p278 = scmp.eq.s32.totalorder %s21, 0
      // Predicated region
      $region29: #{dice_loss_pallas.1} parent=27 // pred_check
        %p279 = pneg %p278
      $region30: #{dice_loss_pallas.1} parent=27 // pred_check_branch
        %281 = sbr.rel (%p279) target = $region32
      $region31: #{dice_loss_pallas.1} parent=27 // pred_region
        %vm282 = vcmask 3072
        %283 = vst.msk [vmem:[#allocation2] sm:$0xf] %vm282, 0.0
        %284 = vst.msk [vmem:[#allocation3] sm:$0xf] %vm282, 0.0
        %285 = vst.msk [vmem:[#allocation4] sm:$0xf] %vm282, 0.0
      $region32: #{dice_loss_pallas.1} parent=27 // pred_fallthru
        _
      %v286 = vld [vmem:[%s255] sm:$0xff]
      %v287 = vld [vmem:[%s264] sm:$0x3]
      %v288 = vlaneseq
      %v289 = vshrl.u32 %v288, 7
      %v290 = vlaneseq
      %v291 = vshrl.u32 %v290, 7
      %v292 = vsub.s32 0, %v291
      %v293 = vrot.slane %v287, %v292
      %v294 = vlaneseq
      %v295 = vshrl.u32 %v294, 7
      %v296 = vsub.s32 1, %v295
      %v297 = vrot.slane %v287, %v296
      %vm298 = vcmp.eq.s32.totalorder %v293, %v289
      %vm299 = vcmp.eq.s32.totalorder %v297, %v289
      %v300 = vsel %vm298, 1, 0
      %v301 = vsel %vm299, 1, 0
      %v302 = vcvt.s32.f32 %v300
      %v303 = vcvt.s32.f32 %v301
      %v305 = vcombine.high %v286, %v286
      %vm307 = vcmask 1043456
      %v308 = vsel %vm307, %v286, -inf
      %v309 = vrot.slane %v308, 4
      %v310 = vmax.f32 %v308, %v309
      %v311 = vrot.slane %v310, 2
      %v312 = vmax.f32 %v310, %v311
      %v313 = vrot.slane %v312, 1
      %v314 = vmax.f32 %v312, %v313
      %v315 = vsel %vm307, %v305, -inf
      %v316 = vrot.slane %v315, 4
      %v317 = vmax.f32 %v315, %v316
      %v318 = vrot.slane %v317, 2
      %v319 = vmax.f32 %v317, %v318
      %v320 = vrot.slane %v319, 1
      %v321 = vmax.f32 %v319, %v320
      %v324 = vcombine.low %v314, %v321
      %v326 = vsub.f32 %v286, %v324
      %v327 = vmul.f32 %v326, 1.442695
      %v328 = vpow.pop %v327
      %v330 = vcombine.high %v328, %v328
      %v332 = vsel %vm307, %v328, 0.0
      %v333 = vrot.slane %v332, 4
      %v334 = vadd.f32 %v332, %v333
      %v335 = vrot.slane %v334, 2
      %v336 = vadd.f32 %v334, %v335
      %v337 = vrot.slane %v336, 1
      %v338 = vadd.f32 %v336, %v337
      %v339 = vsel %vm307, %v330, 0.0
      %v340 = vrot.slane %v339, 4
      %v341 = vadd.f32 %v339, %v340
      %v342 = vrot.slane %v341, 2
      %v343 = vadd.f32 %v341, %v342
      %v344 = vrot.slane %v343, 1
      %v345 = vadd.f32 %v343, %v344
      %v346 = vrcp.pop %v338
      %v347 = vrcp.pop %v345
      %v350 = vcombine.low %v346, %v347
      %v352 = vmul.f32 %v328, %v350
      %v353 = vld [vmem:[#allocation2] sm:$0xf]
      %v356 = vcombine.low %v302, %v303
      %v358 = vmul.f32 %v352, %v356
      %v360 = vcombine.high %v358, %v358
      %v362 = vsel %vm307, %v358, 0.0
      %v363 = vsel %vm307, %v360, 0.0
      %v364 = vadd.f32 %v362, %v363
      %365 = vadd.xlane.f32.xlu0 %v364
      %v366 = vpop.xlane.xlu0 %365
      %v367 = vadd.f32 %v353, %v366
      %vm368 = vcmask 3072
      %369 = vst.msk [vmem:[#allocation2] sm:$0xf] %vm368, %v367
      %v370 = vld [vmem:[#allocation3] sm:$0xf]
      %v372 = vcombine.high %v352, %v352
      %v374 = vsel %vm307, %v352, 0.0
      %v375 = vsel %vm307, %v372, 0.0
      %v376 = vadd.f32 %v374, %v375
      %377 = vadd.xlane.f32.xlu0 %v376
      %v378 = vpop.xlane.xlu0 %377
      %v379 = vadd.f32 %v370, %v378
      %380 = vst.msk [vmem:[#allocation3] sm:$0xf] %vm368, %v379
      %v381 = vld [vmem:[#allocation4] sm:$0xf]
      %v382 = vsel %vm307, %v302, 0.0
      %v383 = vsel %vm307, %v303, 0.0
      %v384 = vadd.f32 %v382, %v383
      %385 = vadd.xlane.f32.xlu0 %v384
      %v386 = vpop.xlane.xlu0 %385
      %v387 = vadd.f32 %v381, %v386
      %388 = vst.msk [vmem:[#allocation4] sm:$0xf] %vm368, %v387
      // Predicated region
      $region33: #{dice_loss_pallas.1} parent=27 // pred_check
        %p389 = pneg %p278
      $region34: #{dice_loss_pallas.1} parent=27 // pred_check_branch
        %391 = sbr.rel (%p389) target = $region36
      $region35: #{dice_loss_pallas.1} parent=27 // pred_region
        %v392 = vld [vmem:[#allocation2] sm:$0xf]
        %393 = vst.msk [vmem:[%s269] sm:$0xf] %vm368, %v392
        %v394 = vld [vmem:[#allocation3] sm:$0xf]
        %395 = vst.msk [vmem:[%s273] sm:$0xf] %vm368, %v394
        %v396 = vld [vmem:[#allocation4] sm:$0xf]
        %397 = vst.msk [vmem:[%s277] sm:$0xf] %vm368, %v396
      $region36: #{dice_loss_pallas.1} parent=27 // pred_fallthru
        _
      %p398 = scmp.lt.s32.totalorder %s20, 1
      %s399 = scalar_select %p398, %s20, 1
      %s400 = smul.addr %s399, 4
      %s401 = scalar_lea.vmem %s2, %s400
      %p402 = scmp.lt.s32.totalorder %s20, 1
      %s403 = scalar_select %p402, %s20, 1
      %s404 = smul.addr %s403, 4
      %s405 = scalar_lea.vmem %s3, %s404
      %p406 = scmp.lt.s32.totalorder %s20, 1
      %s407 = scalar_select %p406, %s20, 1
      %s408 = smul.addr %s407, 4
      %s409 = scalar_lea.vmem %s4, %s408
      // Predicated region
      $region37: #{dice_loss_pallas.1} parent=27 // pred_check
        %p410 = pneg %p102
      $region38: #{dice_loss_pallas.1} parent=27 // pred_check_branch
        %412 = sbr.rel (%p410) target = $region40
      $region39: #{dice_loss_pallas.1} parent=27 // pred_region
        _
      $region40: #{dice_loss_pallas.1} parent=27 // pred_fallthru
        _
      // Predicated region
      $region41: #{dice_loss_pallas.1} parent=27 // pred_check
        %p413 = pneg %p128
      $region42: #{dice_loss_pallas.1} parent=27 // pred_check_branch
        %415 = sbr.rel (%p413) target = $region44
      $region43: #{dice_loss_pallas.1} parent=27 // pred_region
        _
      $region44: #{dice_loss_pallas.1} parent=27 // pred_fallthru
        _
      // Predicated region
      $region45: #{dice_loss_pallas.1} parent=27 // pred_check
        %p416 = pneg %p154
      $region46: #{dice_loss_pallas.1} parent=27 // pred_check_branch
        %418 = sbr.rel (%p416) target = $region48
      $region47: #{dice_loss_pallas.1} parent=27 // pred_region
        _
      $region48: #{dice_loss_pallas.1} parent=27 // pred_fallthru
        _
    $region28: #{dice_loss_pallas.1} parent=5 // pred_fallthru
      _
    %p419 = scmp.le.s32.totalorder 2, %s11
    // Predicated region
    $region49: #{dice_loss_pallas.1} parent=5 // pred_check
      %p420 = pneg %p419
    $region50: #{dice_loss_pallas.1} parent=5 // pred_check_branch
      %422 = sbr.rel (%p420) target = $region52
    $region51: #{dice_loss_pallas.1} parent=5 // pred_region
      %s423 = ssub.s32 %s11, 2
      // Predicated region
      $region53: #{dice_loss_pallas.1} parent=51 // pred_check
        %p424 = pneg %p108
      $region54: #{dice_loss_pallas.1} parent=51 // pred_check_branch
        %426 = sbr.rel (%p424) target = $region56
      $region55: #{dice_loss_pallas.1} parent=51 // pred_region
        %p427 = scmp.lt.s32.totalorder %s22, 1
        %s428 = scalar_select %p427, %s22, 1
        %s429 = smul.addr %s428, 4
        %s430 = scalar_lea.vmem %s2, %s429
      $region56: #{dice_loss_pallas.1} parent=51 // pred_fallthru
        _
      // Predicated region
      $region57: #{dice_loss_pallas.1} parent=51 // pred_check
        %p431 = pneg %p134
      $region58: #{dice_loss_pallas.1} parent=51 // pred_check_branch
        %433 = sbr.rel (%p431) target = $region60
      $region59: #{dice_loss_pallas.1} parent=51 // pred_region
        %p434 = scmp.lt.s32.totalorder %s22, 1
        %s435 = scalar_select %p434, %s22, 1
        %s436 = smul.addr %s435, 4
        %s437 = scalar_lea.vmem %s3, %s436
      $region60: #{dice_loss_pallas.1} parent=51 // pred_fallthru
        _
      // Predicated region
      $region61: #{dice_loss_pallas.1} parent=51 // pred_check
        %p438 = pneg %p160
      $region62: #{dice_loss_pallas.1} parent=51 // pred_check_branch
        %440 = sbr.rel (%p438) target = $region64
      $region63: #{dice_loss_pallas.1} parent=51 // pred_region
        %p441 = scmp.lt.s32.totalorder %s22, 1
        %s442 = scalar_select %p441, %s22, 1
        %s443 = smul.addr %s442, 4
        %s444 = scalar_lea.vmem %s4, %s443
      $region64: #{dice_loss_pallas.1} parent=51 // pred_fallthru
        _
    $region52: #{dice_loss_pallas.1} parent=5 // pred_fallthru
      _
  $region6: #{dice_loss_pallas.1} parent=0 // loop_footer
    %s15 = sadd.s32 1, %s11
  $region7: #{dice_loss_pallas.1} parent=0 // loop_footer_branch
    %10 = sbr.rel target = $region3
  $region8: #{dice_loss_pallas.1} parent=0 // loop_exit
    _

</llo_original>
